<compile_context>
chip_gen: v7x
topology: tpu7x:2x2x1
jax: 0.10.0
libtpu: 0.0.40
codegen_flags: <defaults>
</compile_context>

<pallas_src>
import jax
import jax.numpy as jnp
from jax.experimental import pallas as pl
from jax.experimental.pallas import tpu as pltpu

_LANES = 128
_SUBLANES = 8
_TARGET_BLOCK_BYTES = 8 * 1024 * 1024   # ~8 MiB per buffer (per grid block)
_MIN_BLOCK_BYTES = 1 * 1024 * 1024      # ~DMA-efficiency knee (>=85% roofline)


def _hswish_kernel(x_ref, o_ref):
    x = x_ref[...]
    # f32/bf16: compute natively.  Other dtypes go through f32.
    if x.dtype == jnp.float32 or x.dtype == jnp.bfloat16:
        xf = x
    else:
        xf = x.astype(jnp.float32)
    # weak-typed python scalars keep the compute dtype (bf16 stays bf16)
    y = xf * jnp.clip(xf + 3.0, 0.0, 6.0) * (1.0 / 6.0)
    o_ref[...] = y.astype(o_ref.dtype)


def hswish(x: jax.Array, *, target_block_bytes: int = _TARGET_BLOCK_BYTES) -> jax.Array:
    """Hard-swish via a Pallas TPU kernel (elementwise, any shape/dtype)."""
    orig_shape = x.shape
    dtype = x.dtype
    n = x.size
    if n == 0:
        return x

    # Metadata-only flatten for contiguous/default layouts.
    # TODO(synk): if fused after a non-default-layout producer, flatten only
    # trailing dims instead to avoid a hidden relayout copy.
    flat = x.reshape(-1)

    # Pad up to the next lane multiple so one lane-dense (rows, 128) kernel
    # covers everything.  rem == 0 (the common case) is strictly zero-copy.
    rem = n % _LANES
    if rem:
        flat = jnp.pad(flat, (0, _LANES - rem))
    rows = flat.shape[0] // _LANES
    x2d = flat.reshape(rows, _LANES)

    itemsize = jnp.dtype(dtype).itemsize
    # full packed sublanes: 8 for 32-bit, 16 for 16-bit, 32 for 8-bit
    sub_mult = _SUBLANES * max(1, 4 // max(1, itemsize))
    row_bytes = _LANES * itemsize

    def _rows_for_bytes(nbytes):
        return max(sub_mult, (nbytes // row_bytes) // sub_mult * sub_mult)

    tr_budget = _rows_for_bytes(target_block_bytes)  # same byte budget for all dtypes
    min_rows = _rows_for_bytes(_MIN_BLOCK_BYTES)

    if rows > tr_budget:
        tr = tr_budget
    else:
        # Whole tensor fits in one budget block.  Split in two only if both
        # halves stay DMA-efficient (pipeline overlap + v7x's 2 TensorCores);
        # on single-TC v5e/v6e a too-small tile costs more than it saves.
        half = pl.cdiv(pl.cdiv(rows, 2), sub_mult) * sub_mult
        tr = half if half >= min_rows else rows
    tr = min(tr, rows)          # tr == rows (full extent) is always legal
    grid = pl.cdiv(rows, tr)    # ragged last block is masked by Pallas

    out2d = pl.pallas_call(
        _hswish_kernel,
        out_shape=jax.ShapeDtypeStruct((rows, _LANES), dtype),
        grid_spec=pltpu.PrefetchScalarGridSpec(
            num_scalar_prefetch=0,
            grid=(grid,),
            in_specs=[pl.BlockSpec((tr, _LANES), lambda i: (i, 0))],
            out_specs=pl.BlockSpec((tr, _LANES), lambda i: (i, 0)),
        ),
        compiler_params=pltpu.CompilerParams(
            # shards the row grid across TensorCores on v7x; harmless elsewhere
            dimension_semantics=("parallel",),
            # in+out double-buffered at <=8 MiB/block = <=32 MiB; cap below
            # v7x's 64 MiB physical VMEM, above v5e/v6e scoped defaults.
            vmem_limit_bytes=48 * 1024 * 1024,
        ),
    )(x2d)

    out = out2d.reshape(-1)
    if rem:
        out = out[:n]
    return out.reshape(orig_shape)


def _hswish_ref(x):
    return (x * jnp.clip(x + 3.0, 0.0, 6.0) / 6.0).astype(x.dtype)


if __name__ == "__main__":
    key = jax.random.PRNGKey(0)

    # main case: NCHW activation, flat size a multiple of 128
    x = jax.random.normal(key, (2, 4, 16, 16), dtype=jnp.float32) * 4.0
    y = hswish(x)
    jax.block_until_ready(y)
    assert y.shape == x.shape and y.dtype == x.dtype
    assert jnp.allclose(y, _hswish_ref(x), atol=1e-5, rtol=1e-5)

    # ragged case: flat size NOT a multiple of 128 (exercises pad/slice path)
    x2 = jax.random.normal(jax.random.PRNGKey(1), (3, 5, 7, 16), dtype=jnp.float32) * 4.0
    y2 = hswish(x2)
    jax.block_until_ready(y2)
    assert jnp.allclose(y2, _hswish_ref(x2), atol=1e-5, rtol=1e-5)

    # bf16 case: native bf16 compute path
    x3 = (jax.random.normal(jax.random.PRNGKey(2), (2, 4, 16, 16)) * 4.0).astype(jnp.bfloat16)
    y3 = hswish(x3)
    jax.block_until_ready(y3)
    assert y3.dtype == jnp.bfloat16
    assert jnp.allclose(y3.astype(jnp.float32), _hswish_ref(x3).astype(jnp.float32),
                        atol=5e-2, rtol=5e-2)

    print("KERNEL_OK")
</pallas_src>

<mosaic_0001>
module attributes {stable_mosaic.version = 11 : i64} {
  func.func @_hswish_kernel(%arg0: i32, %arg1: memref<16x128xf32, #tpu.memory_space<vmem>>, %arg2: memref<16x128xf32, #tpu.memory_space<vmem>>) attributes {dimension_semantics = [#tpu.dimension_semantics<parallel>], iteration_bounds = array<i64: 1>, scalar_prefetch = 0 : i64, scratch_operands = 0 : i64, tpu.core_type = #tpu.core_type<tc>, window_params = [{transform_indices = @transform_0, window_bounds = array<i64: 16, 128>}, {transform_indices = @transform_1, window_bounds = array<i64: 16, 128>}]} {
    %c0 = arith.constant 0 : index
    %c0_0 = arith.constant 0 : index
    %0 = vector.load %arg1[%c0, %c0_0] : memref<16x128xf32, #tpu.memory_space<vmem>>, vector<16x128xf32>
    %cst = arith.constant 3.000000e+00 : f32
    %1 = vector.broadcast %cst : f32 to vector<16x128xf32>
    %2 = arith.addf %0, %1 : vector<16x128xf32>
    %cst_1 = arith.constant 0.000000e+00 : f32
    %cst_2 = arith.constant 6.000000e+00 : f32
    %3 = vector.broadcast %cst_1 : f32 to vector<16x128xf32>
    %4 = arith.maximumf %3, %2 : vector<16x128xf32>
    %5 = vector.broadcast %cst_2 : f32 to vector<16x128xf32>
    %6 = arith.minimumf %5, %4 : vector<16x128xf32>
    %7 = arith.mulf %0, %6 : vector<16x128xf32>
    %cst_3 = arith.constant 0.166666672 : f32
    %8 = vector.broadcast %cst_3 : f32 to vector<16x128xf32>
    %9 = arith.mulf %7, %8 : vector<16x128xf32>
    %c0_4 = arith.constant 0 : index
    %c0_5 = arith.constant 0 : index
    %10 = vector.load %arg2[%c0_4, %c0_5] : memref<16x128xf32, #tpu.memory_space<vmem>>, vector<16x128xf32>
    tpu.vector_store %arg2[%c0_4, %c0_5], %9 {strides = array<i32>} : memref<16x128xf32, #tpu.memory_space<vmem>>, vector<16x128xf32>,
    return
  }
  func.func @transform_0(%arg0: i32) -> (i32, i32) {
    %c0_i32 = arith.constant 0 : i32
    %c0_i32_0 = arith.constant 0 : i32
    return %arg0, %c0_i32 : i32, i32
  }
  func.func @transform_1(%arg0: i32) -> (i32, i32) {
    %c0_i32 = arith.constant 0 : i32
    %c0_i32_0 = arith.constant 0 : i32
    return %arg0, %c0_i32 : i32, i32
  }
}

</mosaic_0001>

<llo_original>
// kernel: tpu_custom_call.1
$region0: #{tpu_custom_call.1}
  #allocation0 [shape = 'u32[]', space=smem, size = 0x4, offset = 0x4, fixed_abs, tag = 'smem constant byte address 0x4 - core index']
  #allocation1 [shape = 'u32[144,128]{1,0:T(1,128)}', space=vmem, size = 0x12000, scoped, tag = 'internal scratch']
  %s0 = inlined_call_operand.hbm [shape: f32[16,128], index: 0, kind: input, shape index: {}]
  %s1 = inlined_call_operand.hbm [shape: f32[16,128], index: 1, kind: output, shape index: {}]
  %s2 = sld [smem:[#allocation0]]
  $region18: #{tpu_custom_call.1} parent=0
    _
  %s4 = ssub.s32 1, %s2
  %s5 = scalar_select 0, %s4, %s2
  $region1: #{tpu_custom_call.1} parent=0
    #allocation2 [shape = 'u8[8192]{0}', space=vmem, size = 0x2000, scoped, tag = 'input window, operand 0, single buffered']
    #allocation3 [shape = 's32[1]{0}', space=sflag, size = 0x4, scoped, tag = 'scoped memory for tpu_custom_call.1']
    #allocation4 [shape = 's32[1]{0}', space=sflag, size = 0x4, scoped, tag = 'scoped memory for tpu_custom_call.1']
    #allocation5 [shape = 'u8[8192]{0}', space=vmem, size = 0x2000, scoped, tag = 'output window, operand 0, single buffered']
    %6 = vsyncpa [#allocation3], 0
    %7 = vsyncpa [#allocation4], 0
    // Predicated region
    $region2: #{tpu_custom_call.1} parent=1 // pred_check
      _
    $region3: #{tpu_custom_call.1} parent=1 // pred_check_branch
      %9 = sbr.rel (0) target = $region5
    $region4: #{tpu_custom_call.1} parent=1 // pred_region
      %s11 = ssub.s32 256, 256
      %12 = vsyncadd [#allocation3], %s11
      %s13 = sshll.u32 [#allocation2], 4
      %s14 = int_to_ptr.vmem [resolvable:$true] %s13
      %19 = dma.hbm_to_vmem [thread:$0]  %s0, 256, %s14, [#allocation3], 128, 128, 8
    $region5: #{tpu_custom_call.1} parent=1 // pred_fallthru
      _
    // Predicated region
    $region6: #{tpu_custom_call.1} parent=1 // pred_check
      _
    $region7: #{tpu_custom_call.1} parent=1 // pred_check_branch
      %21 = sbr.rel (0) target = $region9
    $region8: #{tpu_custom_call.1} parent=1 // pred_region
      %22 = dma.done [#allocation3], 256
    $region9: #{tpu_custom_call.1} parent=1 // pred_fallthru
      _
    %v23 = vld [vmem:[#allocation2] sm:$0xff]
    %v24 = vld [vmem:[#allocation2 + $0x8] sm:$0xff]
    %v25 = vadd.f32 %v23, 3.0
    %v26 = vadd.f32 %v24, 3.0
    %v27 = vmax.f32 %v25, 0.0
    %v28 = vmax.f32 %v26, 0.0
    %v29 = vmin.f32 %v27, 6.0
    %v30 = vmin.f32 %v28, 6.0
    %v31 = vmul.f32 %v23, %v29
    %v32 = vmul.f32 %v24, %v30
    %v33 = vmul.f32 %v31, 0.16666667
    %v34 = vmul.f32 %v32, 0.16666667
    %35 = vst [vmem:[#allocation5] sm:$0xff] %v33
    %36 = vst [vmem:[#allocation5 + $0x8] sm:$0xff] %v34
    // Predicated region
    $region10: #{tpu_custom_call.1} parent=1 // pred_check
      _
    $region11: #{tpu_custom_call.1} parent=1 // pred_check_branch
      %38 = sbr.rel (0) target = $region13
    $region12: #{tpu_custom_call.1} parent=1 // pred_region
      %s40 = ssub.s32 256, 256
      %41 = vsyncadd [#allocation4], %s40
      %s42 = sshll.u32 [#allocation5], 4
      %s43 = int_to_ptr.vmem [resolvable:$true] %s42
      %48 = dma.vmem_to_hbm [thread:$0]  %s43, 256, %s1, [#allocation4], 128, 128, 8
    $region13: #{tpu_custom_call.1} parent=1 // pred_fallthru
      _
    // Predicated region
    $region14: #{tpu_custom_call.1} parent=1 // pred_check
      _
    $region15: #{tpu_custom_call.1} parent=1 // pred_check_branch
      %50 = sbr.rel (0) target = $region17
    $region16: #{tpu_custom_call.1} parent=1 // pred_region
      %51 = dma.done [#allocation4], 256
    $region17: #{tpu_custom_call.1} parent=1 // pred_fallthru
      _
    %52 = vsyncpa [#allocation3], 1
    %53 = vsyncpa [#allocation4], 1

</llo_original>
